<compile_context>
chip_gen: v6e
topology: v6e:2x2x1
jax: 0.10.0
libtpu: 0.0.40
codegen_flags: <defaults>
</compile_context>

<pallas_src>
import functools

import jax
import jax.numpy as jnp
import numpy as np
from jax.experimental import pallas as pl
from jax.experimental.pallas import tpu as pltpu

IMAGENET_MEAN = (0.485, 0.456, 0.406)
IMAGENET_STD = (0.229, 0.224, 0.225)

_MAX_LANE_TILE = 32 * 1024          # lanes per grid step (multiple of 128)
_ROW_QUANTUM = 32                   # uint8 packs 4 sublanes/vreg row -> 32-row native tile
_TARGET_ELEMS = 1 << 20             # ~1M elems/step: 4 MiB f32 out, ~10 MiB dbl-buffered
_VMEM_LIMIT_BYTES = 48 * 1024 * 1024


def _standardize_kernel(x_ref, o_ref, *, num_channels, mean255, inv_std255):
    """(x - mean_c*255) * (1/(std_c*255)) on a lane-dense (rows, lanes) tile.

    Row r of the (B*C, H*W) view corresponds to channel r % C; the per-row constants
    are generated in-kernel (no extra HBM inputs / DMA streams).
    """
    rows = x_ref.shape[0]
    r0 = pl.program_id(0) * rows                       # global row offset of this tile
    row = jax.lax.broadcasted_iota(jnp.int32, (rows, 1), 0) + r0
    ch = row % num_channels

    mean = jnp.zeros((rows, 1), jnp.float32)
    inv = jnp.zeros((rows, 1), jnp.float32)
    for c in range(num_channels):                      # hoisted once per tile, tiny
        sel = ch == c
        mean = jnp.where(sel, mean255[c], mean)
        inv = jnp.where(sel, inv_std255[c], inv)

    # uint8 -> f32 cast in-VMEM: HBM read side stays at 1 byte/elem.
    x = x_ref[...].astype(jnp.float32)
    o_ref[...] = ((x - mean) * inv).astype(o_ref.dtype)


def _round_up(x, m):
    return (x + m - 1) // m * m


def _pick_tiles(R, L):
    """Bounded tiles + cdiv grid (edge blocks are masked; never VMEM-busts)."""
    # Lane (last-dim) tile: full extent when small, else a balanced 128-multiple.
    if L <= _MAX_LANE_TILE:
        tile_l = L
    else:
        nsteps = pl.cdiv(L, _MAX_LANE_TILE)
        tile_l = _round_up(pl.cdiv(L, nsteps), 128)

    # Row tile: full extent when small, else a 32-multiple sized toward the per-step
    # element target (~4 MiB of f32 output per grid step).
    want_r = max(_ROW_QUANTUM,
                 (_TARGET_ELEMS // max(tile_l, 1)) // _ROW_QUANTUM * _ROW_QUANTUM)
    tile_r = R if R <= want_r else want_r

    # v7x has 2 TensorCores: guarantee >=2 parallel grid steps when possible.
    if pl.cdiv(R, tile_r) * pl.cdiv(L, tile_l) == 1 and L >= 256:
        tile_l = _round_up(pl.cdiv(L, 2), 128)
    return tile_r, tile_l


def _standardize_nchw(image_nchw, out_dtype=jnp.float32):
    B, C, H, W = image_nchw.shape
    R, L = B * C, H * W
    x2d = image_nchw.reshape(R, L)                     # lane-dense 2-D view of NCHW

    tile_r, tile_l = _pick_tiles(R, L)
    grid = (pl.cdiv(R, tile_r), pl.cdiv(L, tile_l))

    mean255 = tuple(float(v) * 255.0 for v in IMAGENET_MEAN)
    inv_std255 = tuple(1.0 / (float(v) * 255.0) for v in IMAGENET_STD)
    kernel = functools.partial(
        _standardize_kernel, num_channels=C, mean255=mean255, inv_std255=inv_std255)

    out2d = pl.pallas_call(
        kernel,
        out_shape=jax.ShapeDtypeStruct((R, L), out_dtype),
        grid_spec=pl.GridSpec(
            grid=grid,
            in_specs=[pl.BlockSpec((tile_r, tile_l), lambda r, l: (r, l))],
            out_specs=pl.BlockSpec((tile_r, tile_l), lambda r, l: (r, l)),
        ),
        compiler_params=pltpu.CompilerParams(
            # Pure elementwise op, no reduction axis: both axes parallel (megacore).
            dimension_semantics=("parallel", "parallel"),
            # Explicit scoped-VMEM limit so larger tiles never trip platform defaults
            # (v5e default 16 MiB); well under v7x's 64 MiB physical VMEM.
            vmem_limit_bytes=_VMEM_LIMIT_BYTES,
        ),
    )(x2d)
    return out2d.reshape(B, C, H, W)


def image_conversion(image, standardize=True, to_channel_first=True,
                     out_dtype=jnp.float32):
    """Pallas implementation of leanai ImageConversion.forward.

    out_dtype defaults to float32 (matches torch .float()); pass jnp.bfloat16 to cut
    write traffic ~40% if the downstream model runs in bf16.
    """
    if to_channel_first:
        if image.ndim != 4:
            raise RuntimeError(
                f"Shape of image must be 4 dimensional. Found shape: {image.shape}")
        # Layout permute on the original (typically uint8) dtype: pure data movement.
        image = jnp.transpose(image, (0, 3, 1, 2))

    if not standardize:
        return image.astype(out_dtype)

    if image.ndim != 4:
        raise RuntimeError(
            f"Shape of image must be 4 dimensional. Found shape: {image.shape}")
    B, C, H, W = image.shape
    if C != len(IMAGENET_MEAN):
        # NOTE: channel axis must already be dim 1 here (matches the torch module,
        # which always standardizes over dim 1 of the possibly-permuted tensor).
        raise RuntimeError(
            f"Expected {len(IMAGENET_MEAN)} channels on dim 1 for standardization, got {C}")
    return _standardize_nchw(image, out_dtype=out_dtype)


if __name__ == "__main__":
    key = jax.random.PRNGKey(0)
    k1, k2 = jax.random.split(key)

    def run_and_check(k, B, H, W):
        x = jax.random.randint(k, (B, H, W, 3), minval=0, maxval=256,
                               dtype=jnp.int32).astype(jnp.uint8)
        y = jax.block_until_ready(
            image_conversion(x, standardize=True, to_channel_first=True))
        mean = np.asarray([v * 255.0 for v in IMAGENET_MEAN], dtype=np.float32)
        std = np.asarray([v * 255.0 for v in IMAGENET_STD], dtype=np.float32)
        ref = np.transpose(np.asarray(x, dtype=np.float32), (0, 3, 1, 2))
        ref = (ref - mean[None, :, None, None]) / std[None, :, None, None]
        assert y.shape == (B, 3, H, W), y.shape
        assert y.dtype == jnp.float32, y.dtype
        np.testing.assert_allclose(np.asarray(y), ref, rtol=1e-6, atol=1e-5)

    # Aligned spatial (L = 256): grid is split along lanes so both v7x TCs get work.
    run_and_check(k1, 2, 16, 16)
    # Non-128-multiple spatial (L = 400): exercises the cdiv grid + masked edge block.
    run_and_check(k2, 2, 20, 20)

    # standardize=False path (pure cast + permute glue).
    x = jax.random.randint(k1, (2, 16, 16, 3), minval=0, maxval=256,
                           dtype=jnp.int32).astype(jnp.uint8)
    y2 = jax.block_until_ready(
        image_conversion(x, standardize=False, to_channel_first=True))
    assert y2.shape == (2, 3, 16, 16) and y2.dtype == jnp.float32

    print("KERNEL_OK")
</pallas_src>

<mosaic_0001>
module attributes {stable_mosaic.version = 11 : i64} {
  func.func @_standardize_kernel(%arg0: i32, %arg1: i32, %arg2: memref<6x128xi8, #tpu.memory_space<vmem>>, %arg3: memref<6x128xf32, #tpu.memory_space<vmem>>) attributes {dimension_semantics = [#tpu.dimension_semantics<parallel>, #tpu.dimension_semantics<parallel>], iteration_bounds = array<i64: 1, 2>, scalar_prefetch = 0 : i64, scratch_operands = 0 : i64, tpu.core_type = #tpu.core_type<tc>, window_params = [{transform_indices = @transform_0, window_bounds = array<i64: 6, 128>}, {transform_indices = @transform_1, window_bounds = array<i64: 6, 128>}]} {
    %c6_i32 = arith.constant 6 : i32
    %0 = arith.muli %arg0, %c6_i32 : i32
    %1 = tpu.iota {dimensions = array<i32: 0>} : vector<6x1xi32>
    %2 = vector.broadcast %0 : i32 to vector<6x1xi32>
    %3 = arith.addi %1, %2 : vector<6x1xi32>
    %c3_i32 = arith.constant 3 : i32
    %c0_i32 = arith.constant 0 : i32
    %4 = arith.cmpi eq, %c3_i32, %c0_i32 : i32
    %c1_i32 = arith.constant 1 : i32
    %5 = arith.select %4, %c1_i32, %c3_i32 : i32
    %6 = vector.broadcast %5 : i32 to vector<6x1xi32>
    %7 = arith.remsi %3, %6 : vector<6x1xi32>
    %c0_i32_0 = arith.constant 0 : i32
    %8 = vector.broadcast %c0_i32_0 : i32 to vector<6x1xi32>
    %9 = arith.cmpi ne, %7, %8 : vector<6x1xi32>
    %c0_i32_1 = arith.constant 0 : i32
    %10 = vector.broadcast %c0_i32_1 : i32 to vector<6x1xi32>
    %11 = arith.cmpi slt, %7, %10 : vector<6x1xi32>
    %c0_i32_2 = arith.constant 0 : i32
    %12 = arith.cmpi slt, %5, %c0_i32_2 : i32
    %13 = vector.broadcast %12 : i1 to vector<6x1xi1>
    %14 = vector.broadcast %13 : vector<6x1xi1> to vector<6x1xi1>
    %15 = arith.xori %11, %14 : vector<6x1xi1>
    %16 = arith.andi %15, %9 : vector<6x1xi1>
    %17 = vector.broadcast %5 : i32 to vector<6x1xi32>
    %18 = arith.addi %7, %17 : vector<6x1xi32>
    %19 = arith.select %16, %18, %7 : vector<6x1xi1>, vector<6x1xi32>
    %cst = arith.constant 0.000000e+00 : f32
    %20 = vector.broadcast %cst : f32 to vector<6x1xf32>
    %cst_3 = arith.constant 0.000000e+00 : f32
    %21 = vector.broadcast %cst_3 : f32 to vector<6x1xf32>
    %c0_i32_4 = arith.constant 0 : i32
    %22 = vector.broadcast %c0_i32_4 : i32 to vector<6x1xi32>
    %23 = arith.cmpi eq, %19, %22 : vector<6x1xi32>
    %cst_5 = arith.constant 1.236750e+02 : f32
    %24 = vector.broadcast %cst_5 : f32 to vector<6x1xf32>
    %25 = arith.select %23, %24, %20 : vector<6x1xi1>, vector<6x1xf32>
    %cst_6 = arith.constant 0.0171247534 : f32
    %26 = vector.broadcast %cst_6 : f32 to vector<6x1xf32>
    %27 = arith.select %23, %26, %21 : vector<6x1xi1>, vector<6x1xf32>
    %c1_i32_7 = arith.constant 1 : i32
    %28 = vector.broadcast %c1_i32_7 : i32 to vector<6x1xi32>
    %29 = arith.cmpi eq, %19, %28 : vector<6x1xi32>
    %cst_8 = arith.constant 1.162800e+02 : f32
    %30 = vector.broadcast %cst_8 : f32 to vector<6x1xf32>
    %31 = arith.select %29, %30, %25 : vector<6x1xi1>, vector<6x1xf32>
    %cst_9 = arith.constant 0.0175070036 : f32
    %32 = vector.broadcast %cst_9 : f32 to vector<6x1xf32>
    %33 = arith.select %29, %32, %27 : vector<6x1xi1>, vector<6x1xf32>
    %c2_i32 = arith.constant 2 : i32
    %34 = vector.broadcast %c2_i32 : i32 to vector<6x1xi32>
    %35 = arith.cmpi eq, %19, %34 : vector<6x1xi32>
    %cst_10 = arith.constant 1.035300e+02 : f32
    %36 = vector.broadcast %cst_10 : f32 to vector<6x1xf32>
    %37 = arith.select %35, %36, %31 : vector<6x1xi1>, vector<6x1xf32>
    %cst_11 = arith.constant 0.0174291935 : f32
    %38 = vector.broadcast %cst_11 : f32 to vector<6x1xf32>
    %39 = arith.select %35, %38, %33 : vector<6x1xi1>, vector<6x1xf32>
    %c0 = arith.constant 0 : index
    %c0_12 = arith.constant 0 : index
    %40 = vector.load %arg2[%c0, %c0_12] : memref<6x128xi8, #tpu.memory_space<vmem>>, vector<6x128xi8>
    %41 = arith.uitofp %40 : vector<6x128xi8> to vector<6x128xf32>
    %42 = vector.broadcast %37 : vector<6x1xf32> to vector<6x128xf32>
    %43 = arith.subf %41, %42 : vector<6x128xf32>
    %44 = vector.broadcast %39 : vector<6x1xf32> to vector<6x128xf32>
    %45 = arith.mulf %43, %44 : vector<6x128xf32>
    %c0_13 = arith.constant 0 : index
    %c0_14 = arith.constant 0 : index
    %46 = vector.load %arg3[%c0_13, %c0_14] : memref<6x128xf32, #tpu.memory_space<vmem>>, vector<6x128xf32>
    tpu.vector_store %arg3[%c0_13, %c0_14], %45 {strides = array<i32>} : memref<6x128xf32, #tpu.memory_space<vmem>>, vector<6x128xf32>,
    return
  }
  func.func @transform_0(%arg0: i32, %arg1: i32) -> (i32, i32) {
    %c0_i32 = arith.constant 0 : i32
    return %arg0, %arg1 : i32, i32
  }
  func.func @transform_1(%arg0: i32, %arg1: i32) -> (i32, i32) {
    %c0_i32 = arith.constant 0 : i32
    return %arg0, %arg1 : i32, i32
  }
}

</mosaic_0001>

<llo_original>
// kernel: tpu_custom_call.1
$region0: #{tpu_custom_call.1}
  #allocation0 [shape = 'u32[]', space=smem, size = 0x4, offset = 0x4, fixed_abs, tag = 'smem constant byte address 0x4 - core index']
  #allocation1 [shape = 'u32[144,128]{1,0:T(1,128)}', space=vmem, size = 0x12000, scoped, tag = 'internal scratch']
  %s0 = inlined_call_operand.hbm [shape: u8[6,256], index: 0, kind: input, shape index: {}]
  %s1 = inlined_call_operand.hbm [shape: f32[6,256], index: 1, kind: output, shape index: {}]
  %s2 = sld [smem:[#allocation0]]
  $region41: #{tpu_custom_call.1} parent=0
    _
  %s4 = ssub.s32 1, %s2
  %s5 = scalar_select 0, %s4, %s2
  $region1: #{tpu_custom_call.1} parent=0
    #allocation2 [shape = 'u8[2048]{0}', space=vmem, size = 0x800, scoped, tag = 'input window, operand 0']
    #allocation3 [shape = 's32[2]{0}', space=sflag, size = 0x8, scoped, tag = 'scoped memory for tpu_custom_call.1']
    #allocation4 [shape = 's32[2]{0}', space=sflag, size = 0x8, scoped, tag = 'scoped memory for tpu_custom_call.1']
    #allocation5 [shape = 'u8[8192]{0}', space=vmem, size = 0x2000, scoped, tag = 'output window, operand 0']
    %6 = vsyncpa [#allocation3], 0
    %s7 = scalar_lea.sflag [#allocation3], 1
    %8 = vsyncpa %s7, 0
    %9 = vsyncpa [#allocation4], 0
    %s10 = scalar_lea.sflag [#allocation4], 1
    %11 = vsyncpa %s10, 0
    loop: start=0, step=1, limit=4
    $region2: #{tpu_custom_call.1} parent=1 // loop_pre_header
      _
    $region3: #{tpu_custom_call.1} parent=1 // loop_header
      %s13 = sphi 0, %s17
      %p14 = scmp.ge.s32.totalorder %s13, 4
      %s20 = sphi 0, %s32
      %s21 = sphi 0, %s28
      %s22 = sphi 0, %s20
      %s23 = sphi 0, %s21
      %s24 = sphi 0, %s22
      %s25 = sphi 0, %s23
      %s37 = sphi 0, %s39
      %s40 = sphi 0, %s37
      %s41 = sphi 0, %s40
      %s57 = sphi 0, %s41
      %s65 = sphi 0, %s67
      %s68 = sphi 0, %s65
      %s69 = sphi 0, %s68
      %s85 = sphi 0, %s69
    $region4: #{tpu_custom_call.1} parent=1 // loop_header_branch
      %16 = sbr.rel (%p14) target = $region8
    $region5: #{tpu_custom_call.1} parent=1 // loop_body
      %s18 = ssub.s32 %s13, 1
      %s19 = ssub.s32 %s13, 2
      %s26 = sadd.s32 1, %s21
      %p27 = scmp.ge.s32.totalorder %s26, 2
      %s28 = scalar_select %p27, 0, %s26
      %s29 = sadd.s32 1, %s20
      %s30 = scalar_select %p27, %s29, %s20
      %p31 = scmp.ge.s32.totalorder %s30, 1
      %s32 = scalar_select %p31, 0, %s30
      %s33 = ssub.s32 %s20, %s32
      %s34 = ssub.s32 %s21, %s28
      %s35 = sor.u32 %s33, %s34
      %p36 = scmp.eq.s32.totalorder %s35, 0
      %s38 = sadd.s32 %s37, 1
      %s39 = scalar_select %p36, %s37, %s38
      %p42 = pneg %p36
      %p43 = scmp.eq.s32.totalorder %s13, 1
      %p44 = por %p42, %p43
      %p45 = scmp.ne.s32.totalorder %s37, %s40
      %p46 = scmp.eq.s32.totalorder %s13, 0
      %p47 = por %p45, %p46
      %p48 = scmp.ne.s32.totalorder %s37, %s40
      %p49 = scmp.eq.s32.totalorder %s18, 1
      %p50 = por %p48, %p49
      %p51 = scmp.ne.s32.totalorder %s40, %s41
      %p52 = scmp.eq.s32.totalorder %s18, 0
      %p53 = por %p51, %p52
      %p54 = scmp.ne.s32.totalorder %s40, %s41
      %p55 = scmp.eq.s32.totalorder %s19, 1
      %p56 = por %p54, %p55
      %p58 = scmp.ne.s32.totalorder %s41, %s57
      %p59 = scmp.eq.s32.totalorder %s19, 0
      %p60 = por %p58, %p59
      %s61 = ssub.s32 %s20, %s32
      %s62 = ssub.s32 %s21, %s28
      %s63 = sor.u32 %s61, %s62
      %p64 = scmp.eq.s32.totalorder %s63, 0
      %s66 = sadd.s32 %s65, 1
      %s67 = scalar_select %p64, %s65, %s66
      %p70 = pneg %p64
      %p71 = scmp.eq.s32.totalorder %s13, 1
      %p72 = por %p70, %p71
      %p73 = scmp.ne.s32.totalorder %s65, %s68
      %p74 = scmp.eq.s32.totalorder %s13, 0
      %p75 = por %p73, %p74
      %p76 = scmp.ne.s32.totalorder %s65, %s68
      %p77 = scmp.eq.s32.totalorder %s18, 1
      %p78 = por %p76, %p77
      %p79 = scmp.ne.s32.totalorder %s68, %s69
      %p80 = scmp.eq.s32.totalorder %s18, 0
      %p81 = por %p79, %p80
      %p82 = scmp.ne.s32.totalorder %s68, %s69
      %p83 = scmp.eq.s32.totalorder %s19, 1
      %p84 = por %p82, %p83
      %p86 = scmp.ne.s32.totalorder %s69, %s85
      %p87 = scmp.eq.s32.totalorder %s19, 0
      %p88 = por %p86, %p87
      %p89 = scmp.le.s32.totalorder 1, %s13
      %p90 = scmp.lt.s32.totalorder %s13, 3
      %p91 = pnand %p89, %p90
      %p92 = pneg %p91
      // Predicated region
      $region9: #{tpu_custom_call.1} parent=5 // pred_check
        _
      $region10: #{tpu_custom_call.1} parent=5 // pred_check_branch
        %94 = sbr.rel (%p91) target = $region12
      $region11: #{tpu_custom_call.1} parent=5 // pred_region
        %s95 = ssub.s32 %s13, 1
      $region12: #{tpu_custom_call.1} parent=5 // pred_fallthru
        _
      %p96 = scmp.lt.s32.totalorder %s13, 2
      // Predicated region
      $region13: #{tpu_custom_call.1} parent=5 // pred_check
        %p97 = pneg %p96
      $region14: #{tpu_custom_call.1} parent=5 // pred_check_branch
        %99 = sbr.rel (%p97) target = $region16
      $region15: #{tpu_custom_call.1} parent=5 // pred_region
        // Predicated region
        $region17: #{tpu_custom_call.1} parent=15 // pred_check
          %p100 = pneg %p47
        $region18: #{tpu_custom_call.1} parent=15 // pred_check_branch
          %102 = sbr.rel (%p100) target = $region20
        $region19: #{tpu_custom_call.1} parent=15 // pred_region
          %s103 = sand.u32 %s37, 1
          %s104 = scalar_lea.sflag [#allocation3], %s103
          %s105 = sand.u32 %s37, 1
          %s106 = smul.addr %s105, 2
          %s107 = scalar_lea.vmem [#allocation2], %s106
          %s109 = ssub.s32 32, 32
          %110 = vsyncadd %s104, %s109
          %s111 = smul.addr %s20, 2
          %s112 = sadd.s32 %s21, %s111
          %s113 = smul.addr %s112, 32
          %s114 = scalar_lea.hbm %s0, %s113
          %s116 = sshll.u32 %s107, 4
          %s117 = int_to_ptr.vmem [resolvable:$true] %s116
          %119 = dma.hbm_to_vmem [thread:$0]  %s114, 32, %s117, %s104
        $region20: #{tpu_custom_call.1} parent=15 // pred_fallthru
          _
      $region16: #{tpu_custom_call.1} parent=5 // pred_fallthru
        _
      %p120 = scmp.le.s32.totalorder 1, %s13
      %p121 = scmp.lt.s32.totalorder %s13, 3
      %p122 = pnand %p120, %p121
      %p123 = pneg %p122
      // Predicated region
      $region21: #{tpu_custom_call.1} parent=5 // pred_check
        _
      $region22: #{tpu_custom_call.1} parent=5 // pred_check_branch
        %125 = sbr.rel (%p122) target = $region24
      $region23: #{tpu_custom_call.1} parent=5 // pred_region
        %s126 = ssub.s32 %s13, 1
        %s127 = sand.u32 %s40, 1
        %s128 = scalar_lea.sflag [#allocation3], %s127
        %s129 = sand.u32 %s40, 1
        %s130 = smul.addr %s129, 2
        %s131 = scalar_lea.vmem [#allocation2], %s130
        // Predicated region
        $region25: #{tpu_custom_call.1} parent=23 // pred_check
          %p132 = pneg %p53
        $region26: #{tpu_custom_call.1} parent=23 // pred_check_branch
          %134 = sbr.rel (%p132) target = $region28
        $region27: #{tpu_custom_call.1} parent=23 // pred_region
          %135 = dma.done %s128, 32
        $region28: #{tpu_custom_call.1} parent=23 // pred_fallthru
          _
        %s136 = sand.u32 %s40, 1
        %s137 = scalar_lea.sflag [#allocation3], %s136
        %s138 = sand.u32 %s40, 1
        %s139 = smul.addr %s138, 2
        %s140 = scalar_lea.vmem [#allocation2], %s139
        %p141 = pneg %p53
        %p142 = pneg %p50
        %p143 = pneg %p81
        %p144 = pneg %p78
        %s145 = sand.u32 %s68, 1
        %s146 = scalar_lea.sflag [#allocation4], %s145
        %s147 = sand.u32 %s68, 1
        %s148 = smul.addr %s147, 8
        %s149 = scalar_lea.vmem [#allocation5], %s148
        %s150 = smul.u32 %s22, 6
        %v151 = vlaneseq
        %v152 = vshrl.u32 %v151, 7
        %v153 = vstv %s150
        %v154 = vadd.s32 %v152, %v153
        %vm155 = vcmp.lt.s32.totalorder %v154, 0
        %v156 = vsub.s32 0, %v154
        %v157 = vsel %vm155, %v156, %v154
        %v158 = vmul.u32.u64.compose %v157, 2863311531
        %v159 = vextract.low.u32 %v158
        %v160 = vextract.high.u32 %v158
        %v161 = vshrl.u32 %v160, 1
        %v162 = vmul.u32 %v161, 3
        %v163 = vsub.s32 %v157, %v162
        %v164 = vsub.s32 0, %v163
        %v165 = vsel %vm155, %v164, %v163
        %vm166 = vcmp.ne.s32.totalorder %v165, 0
        %vm167 = vcmp.lt.s32.totalorder %v165, 0
        %vm168 = vmand %vm167, %vm166
        %v169 = vadd.s32 %v165, 3
        %v170 = vsel %vm168, %v169, %v165
        %vm171 = vcmp.eq.s32.totalorder %v170, 0
        %v172 = vsel %vm171, 123.675, 0.0
        %v173 = vsel %vm171, 0.017124753, 0.0
        %vm174 = vcmp.eq.s32.totalorder %v170, 1
        %v175 = vsel %vm174, 116.28, %v172
        %v176 = vsel %vm174, 0.017507004, %v173
        %vm177 = vcmp.eq.s32.totalorder %v170, 2
        %v178 = vsel %vm177, 103.53, %v175
        %v179 = vsel %vm177, 0.017429193, %v176
        %v180 = vld [vmem:[%s131] sm:$0x3]
        %v181 = vunpack.c.0.s8 %v180
        %v182 = vand.u32 %v181, 255
        %v183 = vcvt.s32.f32 %v182
        %v184 = vsub.f32 %v183, %v178
        %v185 = vmul.f32 %v184, %v179
        %186 = vst [vmem:[%s149] sm:$0x3f] %v185
        %s187 = sand.u32 %s68, 1
        %s188 = scalar_lea.sflag [#allocation4], %s187
        %s189 = sand.u32 %s68, 1
        %s190 = smul.addr %s189, 8
        %s191 = scalar_lea.vmem [#allocation5], %s190
        // Predicated region
        $region29: #{tpu_custom_call.1} parent=23 // pred_check
          %p192 = pneg %p78
        $region30: #{tpu_custom_call.1} parent=23 // pred_check_branch
          %194 = sbr.rel (%p192) target = $region32
        $region31: #{tpu_custom_call.1} parent=23 // pred_region
          %s196 = ssub.s32 128, 128
          %197 = vsyncadd %s188, %s196
          %s198 = smul.addr %s22, 2
          %s199 = sadd.s32 %s23, %s198
          %s200 = smul.addr %s199, 128
          %s201 = scalar_lea.hbm %s1, %s200
          %s203 = sshll.u32 %s191, 4
          %s204 = int_to_ptr.vmem [resolvable:$true] %s203
          %206 = dma.vmem_to_hbm [thread:$0]  %s204, 128, %s201, %s188
        $region32: #{tpu_custom_call.1} parent=23 // pred_fallthru
          _
      $region24: #{tpu_custom_call.1} parent=5 // pred_fallthru
        _
      %p207 = scmp.le.s32.totalorder 2, %s13
      // Predicated region
      $region33: #{tpu_custom_call.1} parent=5 // pred_check
        %p208 = pneg %p207
      $region34: #{tpu_custom_call.1} parent=5 // pred_check_branch
        %210 = sbr.rel (%p208) target = $region36
      $region35: #{tpu_custom_call.1} parent=5 // pred_region
        %s211 = ssub.s32 %s13, 2
        // Predicated region
        $region37: #{tpu_custom_call.1} parent=35 // pred_check
          %p212 = pneg %p84
        $region38: #{tpu_custom_call.1} parent=35 // pred_check_branch
          %214 = sbr.rel (%p212) target = $region40
        $region39: #{tpu_custom_call.1} parent=35 // pred_region
          %s215 = sand.u32 %s69, 1
          %s216 = scalar_lea.sflag [#allocation4], %s215
          %s217 = sand.u32 %s69, 1
          %s218 = smul.addr %s217, 8
          %s219 = scalar_lea.vmem [#allocation5], %s218
          %220 = dma.done %s216, 128
        $region40: #{tpu_custom_call.1} parent=35 // pred_fallthru
          _
      $region36: #{tpu_custom_call.1} parent=5 // pred_fallthru
        _
    $region6: #{tpu_custom_call.1} parent=1 // loop_footer
      %s17 = sadd.s32 1, %s13
    $region7: #{tpu_custom_call.1} parent=1 // loop_footer_branch
      %12 = sbr.rel target = $region3
    $region8: #{tpu_custom_call.1} parent=1 // loop_exit
      _
    %221 = vsyncpa [#allocation3], 1
    %s222 = scalar_lea.sflag [#allocation3], 1
    %223 = vsyncpa %s222, 1
    %224 = vsyncpa [#allocation4], 1
    %s225 = scalar_lea.sflag [#allocation4], 1
    %226 = vsyncpa %s225, 1

</llo_original>
